<compile_context>
chip_gen: v5e
topology: v5e:2x2
jax: 0.10.0
libtpu: 0.0.40
codegen_flags: <defaults>
</compile_context>

<pallas_src>
import jax
import jax.numpy as jnp
from jax.experimental import pallas as pl
from jax.experimental.pallas import tpu as pltpu

RHO = 100.0  # GMoF robustifier constant (smplify-x default)

# Channel rows inside the packed (9, B_pad, JP) VMEM slab.
_JX, _JY, _JZ, _GX, _GY, _CONF, _JW, _POSE, _BETA = range(9)

# Rows inside the (19, B_pad, 1) camera/weights VMEM slab.
(_R00, _R01, _R02, _R10, _R11, _R12, _R20, _R21, _R22,
 _TX, _TY, _TZ, _FX, _FY, _CX, _CY, _DW, _PW, _SW) = range(19)


def _nr_reciprocal(x):
    """EUP approx reciprocal (+1 Newton step -> ~1e-7 rel err), off the VALU."""
    r = pl.reciprocal(x, approx=True)
    return r * (2.0 - x * r)


def _smplify_loss_kernel(cam_ref, packed_ref, out_ref):
    rho2 = RHO * RHO

    # (B_pad, JP) data slabs: batch on sublanes, joints/coeffs on lanes.
    jx = packed_ref[_JX]
    jy = packed_ref[_JY]
    jz = packed_ref[_JZ]

    # Per-batch camera scalars / loss weights as (B_pad, 1) columns that
    # lane-broadcast against the (B_pad, JP) data slabs.
    r00 = cam_ref[_R00]; r01 = cam_ref[_R01]; r02 = cam_ref[_R02]
    r10 = cam_ref[_R10]; r11 = cam_ref[_R11]; r12 = cam_ref[_R12]
    r20 = cam_ref[_R20]; r21 = cam_ref[_R21]; r22 = cam_ref[_R22]
    tx = cam_ref[_TX]; ty = cam_ref[_TY]; tz = cam_ref[_TZ]
    fx = cam_ref[_FX]; fy = cam_ref[_FY]
    cx = cam_ref[_CX]; cy = cam_ref[_CY]
    dw = cam_ref[_DW]; pw = cam_ref[_PW]; sw = cam_ref[_SW]

    # Camera extrinsics: unrolled 3-term VPU multiply-add (do NOT use the MXU).
    xr = jx * r00 + jy * r01 + jz * r02 + tx
    yr = jx * r10 + jy * r11 + jz * r12 + ty
    zr = jx * r20 + jy * r21 + jz * r22 + tz

    # Pinhole projection; divide runs on the otherwise-idle EUP slot.
    inv_z = _nr_reciprocal(zr)
    px = xr * (fx * inv_z) + cx
    py = yr * (fy * inv_z) + cy

    # GMoF-robustified residual (per-axis, summed over x/y).
    dx = packed_ref[_GX] - px
    dy = packed_ref[_GY] - py
    sqx = dx * dx
    sqy = dy * dy
    gmof = rho2 * (sqx * _nr_reciprocal(sqx + rho2)
                   + sqy * _nr_reciprocal(sqy + rho2))

    # Weighted joint term + L2 priors.  Padded lanes / padded batch rows carry
    # zero conf/joint_weights/pose/betas, so they contribute exactly zero.
    w = packed_ref[_JW] * packed_ref[_CONF]
    pose = packed_ref[_POSE]
    beta = packed_ref[_BETA]

    combined = ((dw * dw) * (w * w * gmof)
                + (pw * pw) * (pose * pose)
                + (sw * sw) * (beta * beta))            # (B_pad, JP)

    total = jnp.sum(combined, keepdims=True)            # single XLU reduce -> (1,1)
    out_ref[...] = jnp.broadcast_to(total, out_ref.shape)  # lane-dense store


def smplify_loss(joints, rotation, translation, focal, center,
                 gt_joints, joints_conf, joint_weights, body_pose, betas,
                 loss_weights):
    B, J, _ = joints.shape
    n_lane = max(J, body_pose.shape[1], betas.shape[1])
    JP = ((n_lane + 127) // 128) * 128      # lane axis: multiple of 128
    BP = ((B + 7) // 8) * 8                 # batch rides the sublane axis

    def pad_bj(x, fill=0.0):
        x = x.astype(jnp.float32)
        return jnp.pad(x, ((0, BP - x.shape[0]), (0, JP - x.shape[1])),
                       constant_values=fill)

    # One lane/sublane-dense VMEM slab (layout plumbing only, no compute here).
    packed = jnp.stack([
        pad_bj(joints[:, :, 0]),
        pad_bj(joints[:, :, 1]),
        pad_bj(joints[:, :, 2], fill=1.0),  # keep 1/z finite on every padded slot
        pad_bj(gt_joints[:, :, 0]),
        pad_bj(gt_joints[:, :, 1]),
        pad_bj(joints_conf),
        pad_bj(joint_weights),
        pad_bj(body_pose),
        pad_bj(betas),
    ], axis=0)                              # (9, BP, JP) -> one VMEM DMA

    # One (19, BP, 1) slab of per-batch camera scalars + global loss weights.
    lw = loss_weights.reshape(3).astype(jnp.float32)
    cam_rows = jnp.concatenate([
        rotation.reshape(B, 9),
        translation.reshape(B, 3),
        focal.reshape(B, 2),
        center.reshape(B, 2),
        jnp.broadcast_to(lw, (B, 3)),
    ], axis=1).astype(jnp.float32)          # (B, 19)
    if BP > B:
        # Safe pad row: tz = 1 keeps zr (and 1/zr) finite on padded batch rows;
        # zero weights/conf/pose/betas kill their contribution.
        safe = jnp.zeros((19,), jnp.float32).at[_TZ].set(1.0)
        cam_rows = jnp.concatenate(
            [cam_rows, jnp.broadcast_to(safe, (BP - B, 19))], axis=0)
    cam = cam_rows.T[:, :, None]            # (19, BP, 1) -> lane-broadcast columns

    out = pl.pallas_call(
        _smplify_loss_kernel,
        out_shape=jax.ShapeDtypeStruct((1, 128), jnp.float32),
        in_specs=[pl.BlockSpec(memory_space=pltpu.MemorySpace.VMEM),
                  pl.BlockSpec(memory_space=pltpu.MemorySpace.VMEM)],
        out_specs=pl.BlockSpec(memory_space=pltpu.MemorySpace.VMEM),
        compiler_params=pltpu.CompilerParams(
            # Let XLA fuse the wrapper's pad/stack/transpose producers straight
            # into the kernel inputs (no HBM round trip of the packed slabs).
            allow_input_fusion=[True, True]),
    )(cam, packed)
    return out[0, 0]


def reference_loss(joints, rotation, translation, focal, center,
                   gt_joints, joints_conf, joint_weights, body_pose, betas,
                   loss_weights, rho=RHO):
    """Pure-JAX reference matching the PyTorch forward."""
    rotated = jnp.einsum('bki,bji->bjk', rotation, joints) + translation[:, None, :]
    z = rotated[..., 2:3]
    img = rotated[..., :2] / z * focal[:, None, :] + center[:, None, :]
    diff = gt_joints - img
    sq = diff ** 2
    gmof = rho ** 2 * sq / (sq + rho ** 2)
    w = (joint_weights * joints_conf)[..., None]
    joint_loss = jnp.sum(w ** 2 * gmof) * loss_weights[0] ** 2
    pprior = jnp.sum(body_pose ** 2) * loss_weights[1] ** 2
    shape = jnp.sum(betas ** 2) * loss_weights[2] ** 2
    return joint_loss + pprior + shape


if __name__ == "__main__":
    key = jax.random.PRNGKey(0)
    k1, k2, k3, k4, k5 = jax.random.split(key, 5)

    B, J = 2, 16
    POSE_DIM, BETA_DIM = 63, 10

    # 3D joints in front of the camera (rotation=identity, translation pushes z>0)
    joints = jax.random.normal(k1, (B, J, 3), dtype=jnp.float32) * 0.5
    rotation = jnp.tile(jnp.eye(3, dtype=jnp.float32)[None], (B, 1, 1))
    translation = jnp.array([[0.0, 0.0, 5.0], [0.1, -0.1, 6.0]], dtype=jnp.float32)
    focal = jnp.full((B, 2), 500.0, dtype=jnp.float32)
    center = jnp.full((B, 2), 112.0, dtype=jnp.float32)

    gt_joints = jax.random.uniform(k2, (B, J, 2), dtype=jnp.float32) * 224.0
    joints_conf = jax.random.uniform(k3, (B, J), dtype=jnp.float32)
    joint_weights = jnp.broadcast_to(
        jnp.ones((1, J), dtype=jnp.float32), (B, J))       # glue-level broadcast

    body_pose = jax.random.normal(k4, (B, POSE_DIM), dtype=jnp.float32) * 0.1
    betas = jax.random.normal(k5, (B, BETA_DIM), dtype=jnp.float32) * 0.5

    # [data_weight, body_pose_weight, shape_weight] (registered buffers)
    loss_weights = jnp.array([1.0, 0.5, 0.3], dtype=jnp.float32)

    total = jax.jit(smplify_loss)(
        joints, rotation, translation, focal, center,
        gt_joints, joints_conf, joint_weights, body_pose, betas, loss_weights)
    total = jax.block_until_ready(total)

    ref = reference_loss(
        joints, rotation, translation, focal, center,
        gt_joints, joints_conf, joint_weights, body_pose, betas, loss_weights)

    assert jnp.allclose(total, ref, rtol=1e-4, atol=1e-3), (total, ref)
    print("KERNEL_OK")
</pallas_src>

<mosaic_0001>
module attributes {stable_mosaic.version = 11 : i64} {
  func.func @_smplify_loss_kernel(%arg0: memref<19x8x1xf32, #tpu.memory_space<vmem>>, %arg1: memref<9x8x128xf32, #tpu.memory_space<vmem>>, %arg2: memref<1x128xf32, #tpu.memory_space<vmem>>) attributes {dimension_semantics = [], scalar_prefetch = 0 : i64, scratch_operands = 0 : i64, tpu.core_type = #tpu.core_type<tc>} {
    %c0 = arith.constant 0 : index
    %c0_0 = arith.constant 0 : index
    %c0_1 = arith.constant 0 : index
    %0 = vector.load %arg1[%c0, %c0_0, %c0_1] : memref<9x8x128xf32, #tpu.memory_space<vmem>>, vector<1x8x128xf32>
    %1 = vector.shape_cast %0 : vector<1x8x128xf32> to vector<8x128xf32>
    %c1 = arith.constant 1 : index
    %c0_2 = arith.constant 0 : index
    %c0_3 = arith.constant 0 : index
    %2 = vector.load %arg1[%c1, %c0_2, %c0_3] : memref<9x8x128xf32, #tpu.memory_space<vmem>>, vector<1x8x128xf32>
    %3 = vector.shape_cast %2 : vector<1x8x128xf32> to vector<8x128xf32>
    %c2 = arith.constant 2 : index
    %c0_4 = arith.constant 0 : index
    %c0_5 = arith.constant 0 : index
    %4 = vector.load %arg1[%c2, %c0_4, %c0_5] : memref<9x8x128xf32, #tpu.memory_space<vmem>>, vector<1x8x128xf32>
    %5 = vector.shape_cast %4 : vector<1x8x128xf32> to vector<8x128xf32>
    %c0_6 = arith.constant 0 : index
    %c0_7 = arith.constant 0 : index
    %c0_8 = arith.constant 0 : index
    %6 = vector.load %arg0[%c0_6, %c0_7, %c0_8] : memref<19x8x1xf32, #tpu.memory_space<vmem>>, vector<1x8x1xf32>
    %7 = vector.shape_cast %6 : vector<1x8x1xf32> to vector<8x1xf32>
    %c1_9 = arith.constant 1 : index
    %c0_10 = arith.constant 0 : index
    %c0_11 = arith.constant 0 : index
    %8 = vector.load %arg0[%c1_9, %c0_10, %c0_11] : memref<19x8x1xf32, #tpu.memory_space<vmem>>, vector<1x8x1xf32>
    %9 = vector.shape_cast %8 : vector<1x8x1xf32> to vector<8x1xf32>
    %c2_12 = arith.constant 2 : index
    %c0_13 = arith.constant 0 : index
    %c0_14 = arith.constant 0 : index
    %10 = vector.load %arg0[%c2_12, %c0_13, %c0_14] : memref<19x8x1xf32, #tpu.memory_space<vmem>>, vector<1x8x1xf32>
    %11 = vector.shape_cast %10 : vector<1x8x1xf32> to vector<8x1xf32>
    %c3 = arith.constant 3 : index
    %c0_15 = arith.constant 0 : index
    %c0_16 = arith.constant 0 : index
    %12 = vector.load %arg0[%c3, %c0_15, %c0_16] : memref<19x8x1xf32, #tpu.memory_space<vmem>>, vector<1x8x1xf32>
    %13 = vector.shape_cast %12 : vector<1x8x1xf32> to vector<8x1xf32>
    %c4 = arith.constant 4 : index
    %c0_17 = arith.constant 0 : index
    %c0_18 = arith.constant 0 : index
    %14 = vector.load %arg0[%c4, %c0_17, %c0_18] : memref<19x8x1xf32, #tpu.memory_space<vmem>>, vector<1x8x1xf32>
    %15 = vector.shape_cast %14 : vector<1x8x1xf32> to vector<8x1xf32>
    %c5 = arith.constant 5 : index
    %c0_19 = arith.constant 0 : index
    %c0_20 = arith.constant 0 : index
    %16 = vector.load %arg0[%c5, %c0_19, %c0_20] : memref<19x8x1xf32, #tpu.memory_space<vmem>>, vector<1x8x1xf32>
    %17 = vector.shape_cast %16 : vector<1x8x1xf32> to vector<8x1xf32>
    %c6 = arith.constant 6 : index
    %c0_21 = arith.constant 0 : index
    %c0_22 = arith.constant 0 : index
    %18 = vector.load %arg0[%c6, %c0_21, %c0_22] : memref<19x8x1xf32, #tpu.memory_space<vmem>>, vector<1x8x1xf32>
    %19 = vector.shape_cast %18 : vector<1x8x1xf32> to vector<8x1xf32>
    %c7 = arith.constant 7 : index
    %c0_23 = arith.constant 0 : index
    %c0_24 = arith.constant 0 : index
    %20 = vector.load %arg0[%c7, %c0_23, %c0_24] : memref<19x8x1xf32, #tpu.memory_space<vmem>>, vector<1x8x1xf32>
    %21 = vector.shape_cast %20 : vector<1x8x1xf32> to vector<8x1xf32>
    %c8 = arith.constant 8 : index
    %c0_25 = arith.constant 0 : index
    %c0_26 = arith.constant 0 : index
    %22 = vector.load %arg0[%c8, %c0_25, %c0_26] : memref<19x8x1xf32, #tpu.memory_space<vmem>>, vector<1x8x1xf32>
    %23 = vector.shape_cast %22 : vector<1x8x1xf32> to vector<8x1xf32>
    %c9 = arith.constant 9 : index
    %c0_27 = arith.constant 0 : index
    %c0_28 = arith.constant 0 : index
    %24 = vector.load %arg0[%c9, %c0_27, %c0_28] : memref<19x8x1xf32, #tpu.memory_space<vmem>>, vector<1x8x1xf32>
    %25 = vector.shape_cast %24 : vector<1x8x1xf32> to vector<8x1xf32>
    %c10 = arith.constant 10 : index
    %c0_29 = arith.constant 0 : index
    %c0_30 = arith.constant 0 : index
    %26 = vector.load %arg0[%c10, %c0_29, %c0_30] : memref<19x8x1xf32, #tpu.memory_space<vmem>>, vector<1x8x1xf32>
    %27 = vector.shape_cast %26 : vector<1x8x1xf32> to vector<8x1xf32>
    %c11 = arith.constant 11 : index
    %c0_31 = arith.constant 0 : index
    %c0_32 = arith.constant 0 : index
    %28 = vector.load %arg0[%c11, %c0_31, %c0_32] : memref<19x8x1xf32, #tpu.memory_space<vmem>>, vector<1x8x1xf32>
    %29 = vector.shape_cast %28 : vector<1x8x1xf32> to vector<8x1xf32>
    %c12 = arith.constant 12 : index
    %c0_33 = arith.constant 0 : index
    %c0_34 = arith.constant 0 : index
    %30 = vector.load %arg0[%c12, %c0_33, %c0_34] : memref<19x8x1xf32, #tpu.memory_space<vmem>>, vector<1x8x1xf32>
    %31 = vector.shape_cast %30 : vector<1x8x1xf32> to vector<8x1xf32>
    %c13 = arith.constant 13 : index
    %c0_35 = arith.constant 0 : index
    %c0_36 = arith.constant 0 : index
    %32 = vector.load %arg0[%c13, %c0_35, %c0_36] : memref<19x8x1xf32, #tpu.memory_space<vmem>>, vector<1x8x1xf32>
    %33 = vector.shape_cast %32 : vector<1x8x1xf32> to vector<8x1xf32>
    %c14 = arith.constant 14 : index
    %c0_37 = arith.constant 0 : index
    %c0_38 = arith.constant 0 : index
    %34 = vector.load %arg0[%c14, %c0_37, %c0_38] : memref<19x8x1xf32, #tpu.memory_space<vmem>>, vector<1x8x1xf32>
    %35 = vector.shape_cast %34 : vector<1x8x1xf32> to vector<8x1xf32>
    %c15 = arith.constant 15 : index
    %c0_39 = arith.constant 0 : index
    %c0_40 = arith.constant 0 : index
    %36 = vector.load %arg0[%c15, %c0_39, %c0_40] : memref<19x8x1xf32, #tpu.memory_space<vmem>>, vector<1x8x1xf32>
    %37 = vector.shape_cast %36 : vector<1x8x1xf32> to vector<8x1xf32>
    %c16 = arith.constant 16 : index
    %c0_41 = arith.constant 0 : index
    %c0_42 = arith.constant 0 : index
    %38 = vector.load %arg0[%c16, %c0_41, %c0_42] : memref<19x8x1xf32, #tpu.memory_space<vmem>>, vector<1x8x1xf32>
    %39 = vector.shape_cast %38 : vector<1x8x1xf32> to vector<8x1xf32>
    %c17 = arith.constant 17 : index
    %c0_43 = arith.constant 0 : index
    %c0_44 = arith.constant 0 : index
    %40 = vector.load %arg0[%c17, %c0_43, %c0_44] : memref<19x8x1xf32, #tpu.memory_space<vmem>>, vector<1x8x1xf32>
    %41 = vector.shape_cast %40 : vector<1x8x1xf32> to vector<8x1xf32>
    %c18 = arith.constant 18 : index
    %c0_45 = arith.constant 0 : index
    %c0_46 = arith.constant 0 : index
    %42 = vector.load %arg0[%c18, %c0_45, %c0_46] : memref<19x8x1xf32, #tpu.memory_space<vmem>>, vector<1x8x1xf32>
    %43 = vector.shape_cast %42 : vector<1x8x1xf32> to vector<8x1xf32>
    %44 = vector.broadcast %7 : vector<8x1xf32> to vector<8x128xf32>
    %45 = arith.mulf %1, %44 : vector<8x128xf32>
    %46 = vector.broadcast %9 : vector<8x1xf32> to vector<8x128xf32>
    %47 = arith.mulf %3, %46 : vector<8x128xf32>
    %48 = arith.addf %45, %47 : vector<8x128xf32>
    %49 = vector.broadcast %11 : vector<8x1xf32> to vector<8x128xf32>
    %50 = arith.mulf %5, %49 : vector<8x128xf32>
    %51 = arith.addf %48, %50 : vector<8x128xf32>
    %52 = vector.broadcast %25 : vector<8x1xf32> to vector<8x128xf32>
    %53 = arith.addf %51, %52 : vector<8x128xf32>
    %54 = vector.broadcast %13 : vector<8x1xf32> to vector<8x128xf32>
    %55 = arith.mulf %1, %54 : vector<8x128xf32>
    %56 = vector.broadcast %15 : vector<8x1xf32> to vector<8x128xf32>
    %57 = arith.mulf %3, %56 : vector<8x128xf32>
    %58 = arith.addf %55, %57 : vector<8x128xf32>
    %59 = vector.broadcast %17 : vector<8x1xf32> to vector<8x128xf32>
    %60 = arith.mulf %5, %59 : vector<8x128xf32>
    %61 = arith.addf %58, %60 : vector<8x128xf32>
    %62 = vector.broadcast %27 : vector<8x1xf32> to vector<8x128xf32>
    %63 = arith.addf %61, %62 : vector<8x128xf32>
    %64 = vector.broadcast %19 : vector<8x1xf32> to vector<8x128xf32>
    %65 = arith.mulf %1, %64 : vector<8x128xf32>
    %66 = vector.broadcast %21 : vector<8x1xf32> to vector<8x128xf32>
    %67 = arith.mulf %3, %66 : vector<8x128xf32>
    %68 = arith.addf %65, %67 : vector<8x128xf32>
    %69 = vector.broadcast %23 : vector<8x1xf32> to vector<8x128xf32>
    %70 = arith.mulf %5, %69 : vector<8x128xf32>
    %71 = arith.addf %68, %70 : vector<8x128xf32>
    %72 = vector.broadcast %29 : vector<8x1xf32> to vector<8x128xf32>
    %73 = arith.addf %71, %72 : vector<8x128xf32>
    %74 = tpu.reciprocal %73 {approx = true} : vector<8x128xf32> -> vector<8x128xf32>
    %75 = arith.mulf %73, %74 : vector<8x128xf32>
    %cst = arith.constant 2.000000e+00 : f32
    %76 = vector.broadcast %cst : f32 to vector<8x128xf32>
    %77 = arith.subf %76, %75 : vector<8x128xf32>
    %78 = arith.mulf %74, %77 : vector<8x128xf32>
    %79 = vector.broadcast %31 : vector<8x1xf32> to vector<8x128xf32>
    %80 = arith.mulf %79, %78 : vector<8x128xf32>
    %81 = arith.mulf %53, %80 : vector<8x128xf32>
    %82 = vector.broadcast %35 : vector<8x1xf32> to vector<8x128xf32>
    %83 = arith.addf %81, %82 : vector<8x128xf32>
    %84 = vector.broadcast %33 : vector<8x1xf32> to vector<8x128xf32>
    %85 = arith.mulf %84, %78 : vector<8x128xf32>
    %86 = arith.mulf %63, %85 : vector<8x128xf32>
    %87 = vector.broadcast %37 : vector<8x1xf32> to vector<8x128xf32>
    %88 = arith.addf %86, %87 : vector<8x128xf32>
    %c3_47 = arith.constant 3 : index
    %c0_48 = arith.constant 0 : index
    %c0_49 = arith.constant 0 : index
    %89 = vector.load %arg1[%c3_47, %c0_48, %c0_49] : memref<9x8x128xf32, #tpu.memory_space<vmem>>, vector<1x8x128xf32>
    %90 = vector.shape_cast %89 : vector<1x8x128xf32> to vector<8x128xf32>
    %91 = arith.subf %90, %83 : vector<8x128xf32>
    %c4_50 = arith.constant 4 : index
    %c0_51 = arith.constant 0 : index
    %c0_52 = arith.constant 0 : index
    %92 = vector.load %arg1[%c4_50, %c0_51, %c0_52] : memref<9x8x128xf32, #tpu.memory_space<vmem>>, vector<1x8x128xf32>
    %93 = vector.shape_cast %92 : vector<1x8x128xf32> to vector<8x128xf32>
    %94 = arith.subf %93, %88 : vector<8x128xf32>
    %95 = arith.mulf %91, %91 : vector<8x128xf32>
    %96 = arith.mulf %94, %94 : vector<8x128xf32>
    %cst_53 = arith.constant 1.000000e+04 : f32
    %97 = vector.broadcast %cst_53 : f32 to vector<8x128xf32>
    %98 = arith.addf %95, %97 : vector<8x128xf32>
    %99 = tpu.reciprocal %98 {approx = true} : vector<8x128xf32> -> vector<8x128xf32>
    %100 = arith.mulf %98, %99 : vector<8x128xf32>
    %cst_54 = arith.constant 2.000000e+00 : f32
    %101 = vector.broadcast %cst_54 : f32 to vector<8x128xf32>
    %102 = arith.subf %101, %100 : vector<8x128xf32>
    %103 = arith.mulf %99, %102 : vector<8x128xf32>
    %104 = arith.mulf %95, %103 : vector<8x128xf32>
    %cst_55 = arith.constant 1.000000e+04 : f32
    %105 = vector.broadcast %cst_55 : f32 to vector<8x128xf32>
    %106 = arith.addf %96, %105 : vector<8x128xf32>
    %107 = tpu.reciprocal %106 {approx = true} : vector<8x128xf32> -> vector<8x128xf32>
    %108 = arith.mulf %106, %107 : vector<8x128xf32>
    %cst_56 = arith.constant 2.000000e+00 : f32
    %109 = vector.broadcast %cst_56 : f32 to vector<8x128xf32>
    %110 = arith.subf %109, %108 : vector<8x128xf32>
    %111 = arith.mulf %107, %110 : vector<8x128xf32>
    %112 = arith.mulf %96, %111 : vector<8x128xf32>
    %113 = arith.addf %104, %112 : vector<8x128xf32>
    %cst_57 = arith.constant 1.000000e+04 : f32
    %114 = vector.broadcast %cst_57 : f32 to vector<8x128xf32>
    %115 = arith.mulf %114, %113 : vector<8x128xf32>
    %c6_58 = arith.constant 6 : index
    %c0_59 = arith.constant 0 : index
    %c0_60 = arith.constant 0 : index
    %116 = vector.load %arg1[%c6_58, %c0_59, %c0_60] : memref<9x8x128xf32, #tpu.memory_space<vmem>>, vector<1x8x128xf32>
    %117 = vector.shape_cast %116 : vector<1x8x128xf32> to vector<8x128xf32>
    %c5_61 = arith.constant 5 : index
    %c0_62 = arith.constant 0 : index
    %c0_63 = arith.constant 0 : index
    %118 = vector.load %arg1[%c5_61, %c0_62, %c0_63] : memref<9x8x128xf32, #tpu.memory_space<vmem>>, vector<1x8x128xf32>
    %119 = vector.shape_cast %118 : vector<1x8x128xf32> to vector<8x128xf32>
    %120 = arith.mulf %117, %119 : vector<8x128xf32>
    %c7_64 = arith.constant 7 : index
    %c0_65 = arith.constant 0 : index
    %c0_66 = arith.constant 0 : index
    %121 = vector.load %arg1[%c7_64, %c0_65, %c0_66] : memref<9x8x128xf32, #tpu.memory_space<vmem>>, vector<1x8x128xf32>
    %122 = vector.shape_cast %121 : vector<1x8x128xf32> to vector<8x128xf32>
    %c8_67 = arith.constant 8 : index
    %c0_68 = arith.constant 0 : index
    %c0_69 = arith.constant 0 : index
    %123 = vector.load %arg1[%c8_67, %c0_68, %c0_69] : memref<9x8x128xf32, #tpu.memory_space<vmem>>, vector<1x8x128xf32>
    %124 = vector.shape_cast %123 : vector<1x8x128xf32> to vector<8x128xf32>
    %125 = arith.mulf %39, %39 : vector<8x1xf32>
    %126 = arith.mulf %120, %120 : vector<8x128xf32>
    %127 = arith.mulf %126, %115 : vector<8x128xf32>
    %128 = vector.broadcast %125 : vector<8x1xf32> to vector<8x128xf32>
    %129 = arith.mulf %128, %127 : vector<8x128xf32>
    %130 = arith.mulf %41, %41 : vector<8x1xf32>
    %131 = arith.mulf %122, %122 : vector<8x128xf32>
    %132 = vector.broadcast %130 : vector<8x1xf32> to vector<8x128xf32>
    %133 = arith.mulf %132, %131 : vector<8x128xf32>
    %134 = arith.addf %129, %133 : vector<8x128xf32>
    %135 = arith.mulf %43, %43 : vector<8x1xf32>
    %136 = arith.mulf %124, %124 : vector<8x128xf32>
    %137 = vector.broadcast %135 : vector<8x1xf32> to vector<8x128xf32>
    %138 = arith.mulf %137, %136 : vector<8x128xf32>
    %139 = arith.addf %134, %138 : vector<8x128xf32>
    %140 = vector.shape_cast %139 : vector<8x128xf32> to vector<1x8x128xf32>
    %cst_70 = arith.constant dense<0.000000e+00> : vector<1xf32>
    %141 = vector.multi_reduction <add>, %140, %cst_70 [1, 2] : vector<1x8x128xf32> to vector<1xf32>
    %142 = vector.shape_cast %141 : vector<1xf32> to vector<1x1x1xf32>
    %143 = vector.extract %142[0, 0, 0] : f32 from vector<1x1x1xf32>
    %144 = vector.broadcast %143 : f32 to vector<1x1xf32>
    %145 = vector.shape_cast %144 : vector<1x1xf32> to vector<1x1xf32>
    %146 = vector.broadcast %145 : vector<1x1xf32> to vector<1x128xf32>
    %c0_71 = arith.constant 0 : index
    %c0_72 = arith.constant 0 : index
    %147 = vector.load %arg2[%c0_71, %c0_72] : memref<1x128xf32, #tpu.memory_space<vmem>>, vector<1x128xf32>
    tpu.vector_store %arg2[%c0_71, %c0_72], %146 {strides = array<i32>} : memref<1x128xf32, #tpu.memory_space<vmem>>, vector<1x128xf32>,
    return
  }
}

</mosaic_0001>

<llo_original>
// kernel: smplify_loss.1
$region0: #{smplify_loss.1}
  #allocation0 [shape = 'u32[]', space=smem, size = 0x4, offset = 0x4, fixed_abs, tag = 'smem constant byte address 0x4 - core index']
  #allocation1 [shape = 'u32[72,128]{1,0:T(1,128)}', space=vmem, size = 0x9000, scoped, tag = 'internal scratch']
  %s0 = inlined_call_operand.vmem [shape: f32[19,8,1], index: 0, kind: input, shape index: {}]
  %s1 = inlined_call_operand.vmem [shape: f32[9,8,128], index: 1, kind: input, shape index: {}]
  %s2 = inlined_call_operand.hbm [shape: f32[1,128], index: 2, kind: output, shape index: {}]
  %s3 = sld [smem:[#allocation0]]
  $region18: #{smplify_loss.1} parent=0
    _
  %s5 = ssub.s32 1, %s3
  %s6 = scalar_select 0, %s5, %s3
  $region1: #{smplify_loss.1} parent=0
    #allocation2 [shape = 'u8[512]{0}', space=vmem, size = 0x400, scoped, tag = 'output window, operand 0, single buffered']
    #allocation3 [shape = 's32[1]{0}', space=sflag, size = 0x4, scoped, tag = 'scoped memory for smplify_loss.1']
    %7 = vsyncpa [#allocation3], 0
    // Predicated region
    $region2: #{smplify_loss.1} parent=1 // pred_check
      _
    $region3: #{smplify_loss.1} parent=1 // pred_check_branch
      %9 = sbr.rel (0) target = $region5
    $region4: #{smplify_loss.1} parent=1 // pred_region
      _
    $region5: #{smplify_loss.1} parent=1 // pred_fallthru
      _
    // Predicated region
    $region6: #{smplify_loss.1} parent=1 // pred_check
      _
    $region7: #{smplify_loss.1} parent=1 // pred_check_branch
      %11 = sbr.rel (0) target = $region9
    $region8: #{smplify_loss.1} parent=1 // pred_region
      _
    $region9: #{smplify_loss.1} parent=1 // pred_fallthru
      _
    %v12 = vld [vmem:[%s1] sm:$0xff]
    %s13 = scalar_lea.vmem %s1, 8
    %v14 = vld [vmem:[%s13] sm:$0xff]
    %s15 = scalar_lea.vmem %s1, 16
    %v16 = vld [vmem:[%s15] sm:$0xff]
    %v17 = vld [vmem:[%s0] sm:$0xff]
    %s18 = scalar_lea.vmem %s0, 8
    %v19 = vld [vmem:[%s18] sm:$0xff]
    %s20 = scalar_lea.vmem %s0, 16
    %v21 = vld [vmem:[%s20] sm:$0xff]
    %s22 = scalar_lea.vmem %s0, 24
    %v23 = vld [vmem:[%s22] sm:$0xff]
    %s24 = scalar_lea.vmem %s0, 32
    %v25 = vld [vmem:[%s24] sm:$0xff]
    %s26 = scalar_lea.vmem %s0, 40
    %v27 = vld [vmem:[%s26] sm:$0xff]
    %s28 = scalar_lea.vmem %s0, 48
    %v29 = vld [vmem:[%s28] sm:$0xff]
    %s30 = scalar_lea.vmem %s0, 56
    %v31 = vld [vmem:[%s30] sm:$0xff]
    %s32 = scalar_lea.vmem %s0, 64
    %v33 = vld [vmem:[%s32] sm:$0xff]
    %s34 = scalar_lea.vmem %s0, 72
    %v35 = vld [vmem:[%s34] sm:$0xff]
    %s36 = scalar_lea.vmem %s0, 80
    %v37 = vld [vmem:[%s36] sm:$0xff]
    %s38 = scalar_lea.vmem %s0, 88
    %v39 = vld [vmem:[%s38] sm:$0xff]
    %s40 = scalar_lea.vmem %s0, 96
    %v41 = vld [vmem:[%s40] sm:$0xff]
    %s42 = scalar_lea.vmem %s0, 104
    %v43 = vld [vmem:[%s42] sm:$0xff]
    %s44 = scalar_lea.vmem %s0, 112
    %v45 = vld [vmem:[%s44] sm:$0xff]
    %s46 = scalar_lea.vmem %s0, 120
    %v47 = vld [vmem:[%s46] sm:$0xff]
    %s48 = scalar_lea.vmem %s0, 128
    %v49 = vld [vmem:[%s48] sm:$0xff]
    %s50 = scalar_lea.vmem %s0, 136
    %v51 = vld [vmem:[%s50] sm:$0xff]
    %s52 = scalar_lea.vmem %s0, 144
    %v53 = vld [vmem:[%s52] sm:$0xff]
    %55 = vset.pattern.permute.xlu0 0
    %56 = vperm.xlu0 %55, %v17
    %v57 = vpop.permute.xlu0 %56
    %v59 = vmul.f32 %v12, %v57
    %61 = vset.pattern.permute.xlu0 0
    %62 = vperm.xlu0 %61, %v19
    %v63 = vpop.permute.xlu0 %62
    %v65 = vmul.f32 %v14, %v63
    %v66 = vadd.f32 %v59, %v65
    %68 = vset.pattern.permute.xlu0 0
    %69 = vperm.xlu0 %68, %v21
    %v70 = vpop.permute.xlu0 %69
    %v72 = vmul.f32 %v16, %v70
    %v73 = vadd.f32 %v66, %v72
    %75 = vset.pattern.permute.xlu0 0
    %76 = vperm.xlu0 %75, %v35
    %v77 = vpop.permute.xlu0 %76
    %v79 = vadd.f32 %v73, %v77
    %81 = vset.pattern.permute.xlu0 0
    %82 = vperm.xlu0 %81, %v23
    %v83 = vpop.permute.xlu0 %82
    %v85 = vmul.f32 %v12, %v83
    %87 = vset.pattern.permute.xlu0 0
    %88 = vperm.xlu0 %87, %v25
    %v89 = vpop.permute.xlu0 %88
    %v91 = vmul.f32 %v14, %v89
    %v92 = vadd.f32 %v85, %v91
    %94 = vset.pattern.permute.xlu0 0
    %95 = vperm.xlu0 %94, %v27
    %v96 = vpop.permute.xlu0 %95
    %v98 = vmul.f32 %v16, %v96
    %v99 = vadd.f32 %v92, %v98
    %101 = vset.pattern.permute.xlu0 0
    %102 = vperm.xlu0 %101, %v37
    %v103 = vpop.permute.xlu0 %102
    %v105 = vadd.f32 %v99, %v103
    %107 = vset.pattern.permute.xlu0 0
    %108 = vperm.xlu0 %107, %v29
    %v109 = vpop.permute.xlu0 %108
    %v111 = vmul.f32 %v12, %v109
    %113 = vset.pattern.permute.xlu0 0
    %114 = vperm.xlu0 %113, %v31
    %v115 = vpop.permute.xlu0 %114
    %v117 = vmul.f32 %v14, %v115
    %v118 = vadd.f32 %v111, %v117
    %120 = vset.pattern.permute.xlu0 0
    %121 = vperm.xlu0 %120, %v33
    %v122 = vpop.permute.xlu0 %121
    %v124 = vmul.f32 %v16, %v122
    %v125 = vadd.f32 %v118, %v124
    %127 = vset.pattern.permute.xlu0 0
    %128 = vperm.xlu0 %127, %v39
    %v129 = vpop.permute.xlu0 %128
    %v131 = vadd.f32 %v125, %v129
    %v132 = vrcp.pop %v131
    %v133 = vmul.f32 %v131, %v132
    %v134 = vsub.f32 2.0, %v133
    %v135 = vmul.f32 %v132, %v134
    %137 = vset.pattern.permute.xlu0 0
    %138 = vperm.xlu0 %137, %v41
    %v139 = vpop.permute.xlu0 %138
    %v141 = vmul.f32 %v139, %v135
    %v142 = vmul.f32 %v79, %v141
    %144 = vset.pattern.permute.xlu0 0
    %145 = vperm.xlu0 %144, %v45
    %v146 = vpop.permute.xlu0 %145
    %v148 = vadd.f32 %v142, %v146
    %150 = vset.pattern.permute.xlu0 0
    %151 = vperm.xlu0 %150, %v43
    %v152 = vpop.permute.xlu0 %151
    %v154 = vmul.f32 %v152, %v135
    %v155 = vmul.f32 %v105, %v154
    %157 = vset.pattern.permute.xlu0 0
    %158 = vperm.xlu0 %157, %v47
    %v159 = vpop.permute.xlu0 %158
    %v161 = vadd.f32 %v155, %v159
    %s162 = scalar_lea.vmem %s1, 24
    %v163 = vld [vmem:[%s162] sm:$0xff]
    %v164 = vsub.f32 %v163, %v148
    %s165 = scalar_lea.vmem %s1, 32
    %v166 = vld [vmem:[%s165] sm:$0xff]
    %v167 = vsub.f32 %v166, %v161
    %v168 = vmul.f32 %v164, %v164
    %v169 = vmul.f32 %v167, %v167
    %v170 = vadd.f32 %v168, 10000.0
    %v171 = vrcp.pop %v170
    %v172 = vmul.f32 %v170, %v171
    %v173 = vsub.f32 2.0, %v172
    %v174 = vmul.f32 %v171, %v173
    %v175 = vmul.f32 %v168, %v174
    %v176 = vadd.f32 %v169, 10000.0
    %v177 = vrcp.pop %v176
    %v178 = vmul.f32 %v176, %v177
    %v179 = vsub.f32 2.0, %v178
    %v180 = vmul.f32 %v177, %v179
    %v181 = vmul.f32 %v169, %v180
    %v182 = vadd.f32 %v175, %v181
    %v183 = vmul.f32 %v182, 10000.0
    %s184 = scalar_lea.vmem %s1, 48
    %v185 = vld [vmem:[%s184] sm:$0xff]
    %s186 = scalar_lea.vmem %s1, 40
    %v187 = vld [vmem:[%s186] sm:$0xff]
    %v188 = vmul.f32 %v185, %v187
    %s189 = scalar_lea.vmem %s1, 56
    %v190 = vld [vmem:[%s189] sm:$0xff]
    %s191 = scalar_lea.vmem %s1, 64
    %v192 = vld [vmem:[%s191] sm:$0xff]
    %v193 = vmul.f32 %v49, %v49
    %v194 = vmul.f32 %v188, %v188
    %v195 = vmul.f32 %v194, %v183
    %197 = vset.pattern.permute.xlu0 0
    %198 = vperm.xlu0 %197, %v193
    %v199 = vpop.permute.xlu0 %198
    %v201 = vmul.f32 %v199, %v195
    %v202 = vmul.f32 %v51, %v51
    %v203 = vmul.f32 %v190, %v190
    %205 = vset.pattern.permute.xlu0 0
    %206 = vperm.xlu0 %205, %v202
    %v207 = vpop.permute.xlu0 %206
    %v209 = vmul.f32 %v207, %v203
    %v210 = vadd.f32 %v201, %v209
    %v211 = vmul.f32 %v53, %v53
    %v212 = vmul.f32 %v192, %v192
    %214 = vset.pattern.permute.xlu0 0
    %215 = vperm.xlu0 %214, %v211
    %v216 = vpop.permute.xlu0 %215
    %v218 = vmul.f32 %v216, %v212
    %v219 = vadd.f32 %v210, %v218
    %220 = vadd.xlane.f32.xlu0 %v219
    %v221 = vpop.xlane.xlu0 %220
    %v222 = vrot.slane %v221, 4
    %v223 = vadd.f32 %v221, %v222
    %v224 = vrot.slane %v223, 2
    %v225 = vadd.f32 %v223, %v224
    %v226 = vrot.slane %v225, 1
    %v227 = vadd.f32 %v225, %v226
    %s228 = vtos %v227
    %v229 = vstv %s228
    %230 = vst [vmem:[#allocation2] sm:$0x1] %v229
    // Predicated region
    $region10: #{smplify_loss.1} parent=1 // pred_check
      _
    $region11: #{smplify_loss.1} parent=1 // pred_check_branch
      %232 = sbr.rel (0) target = $region13
    $region12: #{smplify_loss.1} parent=1 // pred_region
      %234 = vsyncadd [#allocation3], 0
      %s236 = sshll.u32 [#allocation2], 4
      %s237 = int_to_ptr.vmem [resolvable:$true] %s236
      %s238 = sshll.u32 %s2, 4
      %s239 = int_to_ptr.hbm [resolvable:$true] %s238
      %241 = dma.vmem_to_hbm [thread:$0]  %s237, 16, %s239, [#allocation3]
    $region13: #{smplify_loss.1} parent=1 // pred_fallthru
      _
    // Predicated region
    $region14: #{smplify_loss.1} parent=1 // pred_check
      _
    $region15: #{smplify_loss.1} parent=1 // pred_check_branch
      %243 = sbr.rel (0) target = $region17
    $region16: #{smplify_loss.1} parent=1 // pred_region
      %245 = dma.done [#allocation3], 16
    $region17: #{smplify_loss.1} parent=1 // pred_fallthru
      _
    %246 = vsyncpa [#allocation3], 1

</llo_original>
